<compile_context>
chip_gen: v7x
topology: tpu7x:2x2x1
jax: 0.10.0
libtpu: 0.0.40
codegen_flags: <defaults>
</compile_context>

<pallas_src>
import functools

import jax
import jax.numpy as jnp
from jax import lax
from jax.experimental import pallas as pl
from jax.experimental.pallas import tpu as pltpu


def _round_up(x, m):
    return (x + m - 1) // m * m


def _batch_tile(Bp):
    """Batch block: two blocks (one per v7x TensorCore) when the halves stay
    legal bf16/packed sublane tiles (multiple of 16); else the whole batch."""
    half = Bp // 2
    if Bp % 2 == 0 and half % 16 == 0:
        return half
    return Bp


def _choose_time_chunk(T, Bb, H, cap=32, vmem_budget_bytes=16 << 20):
    """Time chunk Tc bounded by a VMEM budget: double-buffered bf16 gx blocks
    (both directions) + f32 sequence-output blocks (both directions)."""
    per_t = 2 * (2 * Bb * 4 * H * 2) + 2 * (2 * Bb * H * 4)
    tc_max = max(1, min(cap, T, vmem_budget_bytes // max(per_t, 1)))
    n_chunks = -(-T // tc_max)
    return -(-T // n_chunks)           # even chunks -> minimal time padding


def _row_tile(N, cap=512):
    """Row tile for the projection matmuls: a multiple of 16 sublanes (legal
    for bf16 operands) that divides N, or the full N."""
    if N <= cap:
        return N
    t = cap - cap % 16
    while t >= 16:
        if N % t == 0:
            return t
        t -= 16
    return N


# ----------------------------------------------------------------------------
# Hoisted input projections (row-tiled, "parallel" grid, bf16 MXU operands,
# f32 accumulation, bf16 gx output).  A single (N, 8H) slab is emitted; the
# recurrence selects the forward/reverse 4H halves via its BlockSpecs.
# ----------------------------------------------------------------------------
def _proj1_kernel(x_ref, w_ref, b_ref, o_ref):
    acc = jnp.dot(x_ref[...], w_ref[...], preferred_element_type=jnp.float32)
    o_ref[...] = (acc + b_ref[...]).astype(o_ref.dtype)


def _proj2_kernel(a_ref, b_ref, wa_ref, wb_ref, bias_ref, o_ref):
    acc = (jnp.dot(a_ref[...], wa_ref[...], preferred_element_type=jnp.float32)
           + jnp.dot(b_ref[...], wb_ref[...], preferred_element_type=jnp.float32))
    o_ref[...] = (acc + bias_ref[...]).astype(o_ref.dtype)


def input_projection(x_flat, w, b):
    """Layer-0 gates_x for both directions: (N, E) @ (E, 8H) + b -> bf16."""
    N, E = x_flat.shape
    G8 = w.shape[1]
    TM = _row_tile(N)
    return pl.pallas_call(
        _proj1_kernel,
        grid=(N // TM,),
        in_specs=[
            pl.BlockSpec((TM, E), lambda i: (i, 0)),
            pl.BlockSpec((E, G8), lambda i: (0, 0)),
            pl.BlockSpec((1, G8), lambda i: (0, 0)),
        ],
        out_specs=pl.BlockSpec((TM, G8), lambda i: (i, 0)),
        out_shape=jax.ShapeDtypeStruct((N, G8), jnp.bfloat16),
        compiler_params=pltpu.CompilerParams(
            dimension_semantics=("parallel",)),
    )(x_flat, w, b)


def input_projection2(a_flat, b_flat, wa, wb, bias):
    """Layers > 0: prev out_f @ Wa + prev out_r @ Wb + bias -> bf16.
    Avoids materializing the (T, B, 2H) forward/backward concat."""
    N, H = a_flat.shape
    G8 = wa.shape[1]
    TM = _row_tile(N)
    return pl.pallas_call(
        _proj2_kernel,
        grid=(N // TM,),
        in_specs=[
            pl.BlockSpec((TM, H), lambda i: (i, 0)),
            pl.BlockSpec((TM, H), lambda i: (i, 0)),
            pl.BlockSpec((H, G8), lambda i: (0, 0)),
            pl.BlockSpec((H, G8), lambda i: (0, 0)),
            pl.BlockSpec((1, G8), lambda i: (0, 0)),
        ],
        out_specs=pl.BlockSpec((TM, G8), lambda i: (i, 0)),
        out_shape=jax.ShapeDtypeStruct((N, G8), jnp.bfloat16),
        compiler_params=pltpu.CompilerParams(
            dimension_semantics=("parallel",)),
    )(a_flat, b_flat, wa, wb, bias)


# ----------------------------------------------------------------------------
# Fused bidirectional LSTM recurrence (one layer, both directions) + optional
# fused classifier on the final hidden states (last layer only).
# Grid = (batch blocks "parallel", time chunks "arbitrary").
# ----------------------------------------------------------------------------
def _bilstm_kernel(*refs, Tc, H, last_layer):
    if last_layer:
        (gxf_ref, gxr_ref, whhf_ref, whhr_ref, lens_ref,
         wcf_ref, wcr_ref, bc_ref,
         logits_ref,
         hf_sc, cf_sc, hr_sc, cr_sc) = refs
    else:
        (gxf_ref, gxr_ref, whhf_ref, whhr_ref, lens_ref,
         outf_ref, outr_ref,
         hf_sc, cf_sc, hr_sc, cr_sc) = refs

    ci = pl.program_id(1)
    nc = pl.num_programs(1)
    T_total = nc * Tc

    @pl.when(ci == 0)
    def _init():
        hf_sc[...] = jnp.zeros_like(hf_sc)
        cf_sc[...] = jnp.zeros_like(cf_sc)
        hr_sc[...] = jnp.zeros_like(hr_sc)
        cr_sc[...] = jnp.zeros_like(cr_sc)

    lens = lens_ref[...]                       # (Bb, 1) int32 valid lengths

    def cell(gates, h, c, valid):
        # gates: (Bb, 4H) f32; PyTorch gate order i, f, g, o (unpadded).
        i_g = jax.nn.sigmoid(gates[:, 0 * H:1 * H])
        f_g = jax.nn.sigmoid(gates[:, 1 * H:2 * H])
        g_g = jnp.tanh(gates[:, 2 * H:3 * H])
        o_g = jax.nn.sigmoid(gates[:, 3 * H:4 * H])
        c_new = f_g * c + i_g * g_g
        h_new = o_g * jnp.tanh(c_new)
        # packed-sequence masking: state only advances while t < seq_len[b]
        return jnp.where(valid, h_new, h), jnp.where(valid, c_new, c)

    def step(tt, carry):
        hf, cf, hr, cr = carry
        t_f = ci * Tc + tt                     # forward physical time
        t_r = (T_total - 1) - t_f              # reverse physical time

        gf = gxf_ref[tt].astype(jnp.float32) + jnp.dot(
            hf, whhf_ref[...], preferred_element_type=jnp.float32)
        gr = gxr_ref[Tc - 1 - tt].astype(jnp.float32) + jnp.dot(
            hr, whhr_ref[...], preferred_element_type=jnp.float32)

        hf, cf = cell(gf, hf, cf, lens > t_f)
        hr, cr = cell(gr, hr, cr, lens > t_r)

        if not last_layer:                     # last layer's sequence is unused
            # NOTE: rows with t >= seq_len hold the frozen last valid state
            # (not zeros); downstream masking keeps h_n / logits exact.
            outf_ref[tt] = hf.astype(outf_ref.dtype)
            outr_ref[Tc - 1 - tt] = hr.astype(outr_ref.dtype)
        return hf, cf, hr, cr

    carry = (hf_sc[...], cf_sc[...], hr_sc[...], cr_sc[...])
    hf, cf, hr, cr = lax.fori_loop(0, Tc, step, carry, unroll=4)

    hf_sc[...] = hf
    cf_sc[...] = cf
    hr_sc[...] = hr
    cr_sc[...] = cr

    if last_layer:
        # Fused classifier: h_n = [h_f | h_r] never leaves VMEM.
        @pl.when(ci == nc - 1)
        def _cls():
            logits_ref[...] = (
                jnp.dot(hf, wcf_ref[...], preferred_element_type=jnp.float32)
                + jnp.dot(hr, wcr_ref[...], preferred_element_type=jnp.float32)
                + bc_ref[...])


def bilstm_layer(gx, w_hh_f, w_hh_r, lens2, *, t_chunk, cls=None):
    """One fused bidirectional LSTM layer.

    gx     : (Tp, Bp, 8H) bf16; columns [0:4H] forward gates, [4H:8H] reverse.
    w_hh_* : (H, 4H) f32.
    lens2  : (Bp, 1) int32.
    cls    : None, or (cls_wf (H,L), cls_wr (H,L), cls_b (1,L)); if given, the
             classifier is fused into the last time chunk and only logits
             (Bp, L) are returned.
    """
    Tp, Bp, G8 = gx.shape
    H = w_hh_f.shape[0]
    G = 4 * H
    assert G8 == 2 * G and Tp % t_chunk == 0
    Tc = t_chunk
    nc = Tp // Tc
    Bb = _batch_tile(Bp)
    nb = Bp // Bb

    kernel = functools.partial(_bilstm_kernel, Tc=Tc, H=H,
                               last_layer=cls is not None)

    in_specs = [
        pl.BlockSpec((Tc, Bb, G), lambda bi, ci: (ci, bi, 0)),           # gx fwd
        pl.BlockSpec((Tc, Bb, G), lambda bi, ci: (nc - 1 - ci, bi, 1)),  # gx rev
        pl.BlockSpec((H, G), lambda bi, ci: (0, 0)),                     # W_hh f
        pl.BlockSpec((H, G), lambda bi, ci: (0, 0)),                     # W_hh r
        pl.BlockSpec((Bb, 1), lambda bi, ci: (bi, 0)),                   # lengths
    ]
    scratch = [pltpu.VMEM((Bb, H), jnp.float32)] * 4                     # h/c f+r

    if cls is None:
        operands = (gx, gx, w_hh_f, w_hh_r, lens2)
        out_specs = [
            pl.BlockSpec((Tc, Bb, H), lambda bi, ci: (ci, bi, 0)),
            pl.BlockSpec((Tc, Bb, H), lambda bi, ci: (nc - 1 - ci, bi, 0)),
        ]
        out_shape = [jax.ShapeDtypeStruct((Tp, Bp, H), jnp.float32)] * 2
    else:
        cls_wf, cls_wr, cls_b = cls
        L = cls_wf.shape[1]
        operands = (gx, gx, w_hh_f, w_hh_r, lens2, cls_wf, cls_wr, cls_b)
        in_specs = in_specs + [
            pl.BlockSpec((H, L), lambda bi, ci: (0, 0)),
            pl.BlockSpec((H, L), lambda bi, ci: (0, 0)),
            pl.BlockSpec((1, L), lambda bi, ci: (0, 0)),
        ]
        out_specs = [pl.BlockSpec((Bb, L), lambda bi, ci: (bi, 0))]
        out_shape = [jax.ShapeDtypeStruct((Bp, L), jnp.float32)]

    # Explicit scoped-VMEM limit from the block-residency estimate
    # (double-buffered streaming blocks + weights + scratch).
    stream = 2 * (2 * Tc * Bb * G * 2) + 2 * (2 * Tc * Bb * H * 4)
    fixed = 2 * H * G * 4 + 4 * Bb * H * 4 + (1 << 20)
    vmem_limit = int(min(max(2 * (stream + fixed), 8 << 20), 32 << 20))

    flops = 2 * (2 * Tp * Bp * H * 4 * H)          # h @ W_hh, both directions
    trans = 2 * (5 * Tp * Bp * H)                  # 3 sigmoid + 2 tanh per unit
    bytes_acc = 2 * (2 * Tp * Bp * G) + 4 * (2 * Tp * Bp * H) + 4 * (2 * H * G)

    results = pl.pallas_call(
        kernel,
        grid=(nb, nc),
        in_specs=in_specs,
        out_specs=out_specs,
        out_shape=out_shape,
        scratch_shapes=scratch,
        compiler_params=pltpu.CompilerParams(
            dimension_semantics=("parallel", "arbitrary"),
            vmem_limit_bytes=vmem_limit),
        cost_estimate=pl.CostEstimate(flops=flops, transcendentals=trans,
                                      bytes_accessed=bytes_acc),
    )(*operands)

    if cls is None:
        return results[0], results[1]
    return results[0]


# ----------------------------------------------------------------------------
# Parameter packing: NO per-gate padding — the gate axis stays at exactly 4H.
# Projection weights are bf16 (MXU operands); recurrent / classifier stay f32.
# ----------------------------------------------------------------------------
def pack_params(params, hidden_size):
    H = hidden_size
    layers = []
    for li, (pf, pr) in enumerate(params["lstm"]):
        w_ih_f, w_hh_f, b_f = pf
        w_ih_r, w_hh_r, b_r = pr
        b_in = jnp.concatenate([b_f, b_r]).reshape(1, 8 * H).astype(jnp.float32)
        entry = {
            "w_hh_f": w_hh_f.astype(jnp.float32),                    # (H, 4H)
            "w_hh_r": w_hh_r.astype(jnp.float32),
            "b_in": b_in,                                            # (1, 8H)
        }
        if li == 0:
            entry["w_in"] = jnp.concatenate(
                [w_ih_f, w_ih_r], axis=1).astype(jnp.bfloat16)       # (E, 8H)
        else:
            # rows 0:H act on prev out_f, rows H:2H on prev out_r
            entry["w_in_a"] = jnp.concatenate(
                [w_ih_f[:H], w_ih_r[:H]], axis=1).astype(jnp.bfloat16)
            entry["w_in_b"] = jnp.concatenate(
                [w_ih_f[H:], w_ih_r[H:]], axis=1).astype(jnp.bfloat16)
        layers.append(entry)

    cls_w = params["cls_w"]                                          # (2H, L)
    return {
        "embedding": params["embedding"],
        "layers": layers,
        "cls_wf": cls_w[:H].astype(jnp.float32),                     # (H, L)
        "cls_wr": cls_w[H:].astype(jnp.float32),
        "cls_b": params["cls_b"].reshape(1, -1).astype(jnp.float32),
        "H": H,
    }


# ----------------------------------------------------------------------------
# Full TextRNN forward (labels=None -> logits, else mean cross-entropy loss).
# ----------------------------------------------------------------------------
def textrnn_forward(packed, x_ids, seq_lens, labels=None):
    T, B = x_ids.shape
    H = packed["H"]
    E = packed["embedding"].shape[1]
    nl = len(packed["layers"])

    # Pad batch to a sublane multiple (padded rows: seq_len = 0 -> inert) and
    # time to a multiple of the VMEM-budgeted chunk (masked steps are inert,
    # including at the start of the reverse direction).
    Bp = _round_up(max(B, 1), 8)
    Bb = _batch_tile(Bp)
    Tc = _choose_time_chunk(T, Bb, H)
    Tp = _round_up(T, Tc)
    N = Tp * Bp

    x_pad = jnp.zeros((Tp, Bp), jnp.int32).at[:T, :B].set(x_ids.astype(jnp.int32))
    lens2 = jnp.zeros((Bp, 1), jnp.int32).at[:B, 0].set(seq_lens.astype(jnp.int32))

    # Embedding lookup: plain-JAX gather; bf16 for the MXU projection.
    # TODO(synk): embedding gather could be fused into the layer-0 projection
    # via PrefetchScalarGridSpec; negligible at E=32, so kept as XLA glue.
    em = packed["embedding"][x_pad].astype(jnp.bfloat16)             # (Tp,Bp,E)

    # TODO(synk): inter-layer dropout (config.dropout) is a train-mode no-op in
    # this eval-mode forward and is omitted.

    logits_full = None
    prev_f = prev_r = None
    for li, lp in enumerate(packed["layers"]):
        if li == 0:
            gx = input_projection(em.reshape(N, E), lp["w_in"], lp["b_in"])
        else:
            gx = input_projection2(
                prev_f.reshape(N, H).astype(jnp.bfloat16),
                prev_r.reshape(N, H).astype(jnp.bfloat16),
                lp["w_in_a"], lp["w_in_b"], lp["b_in"])
        gx = gx.reshape(Tp, Bp, 8 * H)
        if li == nl - 1:
            logits_full = bilstm_layer(
                gx, lp["w_hh_f"], lp["w_hh_r"], lens2, t_chunk=Tc,
                cls=(packed["cls_wf"], packed["cls_wr"], packed["cls_b"]))
        else:
            prev_f, prev_r = bilstm_layer(gx, lp["w_hh_f"], lp["w_hh_r"],
                                          lens2, t_chunk=Tc)

    logits = logits_full[:B]
    if labels is None:
        return logits
    logp = jax.nn.log_softmax(logits, axis=-1)
    nll = -jnp.take_along_axis(logp, labels.reshape(-1, 1), axis=1)
    return jnp.mean(nll)


# ----------------------------------------------------------------------------
# Logical (PyTorch-equivalent) parameter init.
# ----------------------------------------------------------------------------
def init_params(key, vocab_size, embedding_dim, hidden_size, num_layers,
                num_labels):
    H = hidden_size
    k_emb, k_lstm, k_cls = jax.random.split(key, 3)

    # nn.Embedding with embedding_matrix=None -> normal(0, 0.1)
    embedding = 0.1 * jax.random.normal(k_emb, (vocab_size, embedding_dim),
                                        jnp.float32)

    # nn.LSTM default init: uniform(-1/sqrt(H), 1/sqrt(H)); gate order i,f,g,o
    bound = 1.0 / jnp.sqrt(jnp.float32(H))
    lstm_params = []
    keys = jax.random.split(k_lstm, num_layers * 2 * 4)
    ki = 0
    for layer in range(num_layers):
        e_in = embedding_dim if layer == 0 else 2 * H   # bidirectional input
        layer_dirs = []
        for _direction in range(2):
            w_ih = jax.random.uniform(keys[ki], (e_in, 4 * H), jnp.float32,
                                      -bound, bound); ki += 1
            w_hh = jax.random.uniform(keys[ki], (H, 4 * H), jnp.float32,
                                      -bound, bound); ki += 1
            b_ih = jax.random.uniform(keys[ki], (4 * H,), jnp.float32,
                                      -bound, bound); ki += 1
            b_hh = jax.random.uniform(keys[ki], (4 * H,), jnp.float32,
                                      -bound, bound); ki += 1
            layer_dirs.append((w_ih, w_hh, b_ih + b_hh))
        lstm_params.append(tuple(layer_dirs))

    # nn.Linear: weight normal(0, 0.1), bias zero; stored transposed (2H, L)
    cls_w = 0.1 * jax.random.normal(k_cls, (2 * H, num_labels), jnp.float32)
    cls_b = jnp.zeros((num_labels,), jnp.float32)

    return {"embedding": embedding, "lstm": lstm_params,
            "cls_w": cls_w, "cls_b": cls_b}


if __name__ == "__main__":
    # config
    vocab_size = 50
    embedding_dim = 32
    hidden_size = 32
    num_layers = 2
    num_labels = 4
    T, B = 8, 2

    key = jax.random.PRNGKey(0)
    k_params, k_ids = jax.random.split(key)
    params = init_params(k_params, vocab_size, embedding_dim, hidden_size,
                         num_layers, num_labels)
    packed = pack_params(params, hidden_size)

    # token ids (T, B) and descending lengths (pack_padded_sequence convention)
    x = jax.random.randint(k_ids, (T, B), 0, vocab_size, dtype=jnp.int32)
    seq_lens = jnp.array([8, 5], dtype=jnp.int32)

    logits = textrnn_forward(packed, x, seq_lens)        # (B, num_labels)
    jax.block_until_ready(logits)
    assert logits.shape == (B, num_labels)
    print("KERNEL_OK")
</pallas_src>

<mosaic_0001>
module attributes {stable_mosaic.version = 11 : i64} {
  func.func @_proj1_kernel(%arg0: i32, %arg1: memref<64x32xbf16, #tpu.memory_space<vmem>>, %arg2: memref<32x256xbf16, #tpu.memory_space<vmem>>, %arg3: memref<1x256xf32, #tpu.memory_space<vmem>>, %arg4: memref<64x256xbf16, #tpu.memory_space<vmem>>) attributes {dimension_semantics = [#tpu.dimension_semantics<parallel>], iteration_bounds = array<i64: 1>, scalar_prefetch = 0 : i64, scratch_operands = 0 : i64, tpu.core_type = #tpu.core_type<tc>, window_params = [{transform_indices = @transform_0, window_bounds = array<i64: 64, 32>}, {pipeline_mode = #tpu.pipeline_mode<synchronous>, transform_indices = @transform_1, window_bounds = array<i64: 32, 256>}, {pipeline_mode = #tpu.pipeline_mode<synchronous>, transform_indices = @transform_2, window_bounds = array<i64: 1, 256>}, {transform_indices = @transform_3, window_bounds = array<i64: 64, 256>}]} {
    %c0 = arith.constant 0 : index
    %c0_0 = arith.constant 0 : index
    %0 = vector.load %arg1[%c0, %c0_0] : memref<64x32xbf16, #tpu.memory_space<vmem>>, vector<64x32xbf16>
    %c0_1 = arith.constant 0 : index
    %c0_2 = arith.constant 0 : index
    %1 = vector.load %arg2[%c0_1, %c0_2] : memref<32x256xbf16, #tpu.memory_space<vmem>>, vector<32x256xbf16>
    %cst = arith.constant dense<0.000000e+00> : vector<64x256xf32>
    %2 = tpu.matmul %0, %1, %cst {dimension_numbers = #tpu.dot_dimension_numbers<[1], [0], [0], [1], [0, 0, 1, 1], [], []>} : vector<64x32xbf16>, vector<32x256xbf16>, vector<64x256xf32> -> vector<64x256xf32>
    %c0_3 = arith.constant 0 : index
    %c0_4 = arith.constant 0 : index
    %3 = vector.load %arg3[%c0_3, %c0_4] : memref<1x256xf32, #tpu.memory_space<vmem>>, vector<1x256xf32>
    %4 = vector.broadcast %3 : vector<1x256xf32> to vector<64x256xf32>
    %5 = arith.addf %2, %4 : vector<64x256xf32>
    %6 = arith.truncf %5 : vector<64x256xf32> to vector<64x256xbf16>
    %c0_5 = arith.constant 0 : index
    %c0_6 = arith.constant 0 : index
    %7 = vector.load %arg4[%c0_5, %c0_6] : memref<64x256xbf16, #tpu.memory_space<vmem>>, vector<64x256xbf16>
    tpu.vector_store %arg4[%c0_5, %c0_6], %6 {strides = array<i32>} : memref<64x256xbf16, #tpu.memory_space<vmem>>, vector<64x256xbf16>,
    return
  }
  func.func @transform_0(%arg0: i32) -> (i32, i32) {
    %c0_i32 = arith.constant 0 : i32
    %c0_i32_0 = arith.constant 0 : i32
    return %arg0, %c0_i32 : i32, i32
  }
  func.func @transform_1(%arg0: i32) -> (i32, i32) {
    %c0_i32 = arith.constant 0 : i32
    %c0_i32_0 = arith.constant 0 : i32
    %c0_i32_1 = arith.constant 0 : i32
    return %c0_i32, %c0_i32_0 : i32, i32
  }
  func.func @transform_2(%arg0: i32) -> (i32, i32) {
    %c0_i32 = arith.constant 0 : i32
    %c0_i32_0 = arith.constant 0 : i32
    %c0_i32_1 = arith.constant 0 : i32
    return %c0_i32, %c0_i32_0 : i32, i32
  }
  func.func @transform_3(%arg0: i32) -> (i32, i32) {
    %c0_i32 = arith.constant 0 : i32
    %c0_i32_0 = arith.constant 0 : i32
    return %arg0, %c0_i32 : i32, i32
  }
}

</mosaic_0001>

<llo_original>
// kernel: tpu_custom_call.1
$region0: #{tpu_custom_call.1}
  #allocation0 [shape = 'u32[]', space=smem, size = 0x4, offset = 0x4, fixed_abs, tag = 'smem constant byte address 0x4 - core index']
  #allocation1 [shape = 'u32[144,128]{1,0:T(1,128)}', space=vmem, size = 0x12000, scoped, tag = 'internal scratch']
  %s0 = inlined_call_operand.vmem [shape: bf16[64,32], index: 0, kind: input, shape index: {}]
  %s1 = inlined_call_operand.vmem [shape: bf16[32,256], index: 1, kind: input, shape index: {}]
  %s2 = inlined_call_operand.vmem [shape: f32[1,256], index: 2, kind: input, shape index: {}]
  %s3 = inlined_call_operand.hbm [shape: bf16[64,256], index: 3, kind: output, shape index: {}]
  %s4 = sld [smem:[#allocation0]]
  $region22: #{tpu_custom_call.1} parent=0
    _
  %s6 = ssub.s32 1, %s4
  %s7 = scalar_select 0, %s6, %s4
  $region1: #{tpu_custom_call.1} parent=0
    #allocation2 [shape = 'u8[32768]{0}', space=vmem, size = 0x8000, scoped, tag = 'output window, operand 0, single buffered']
    #allocation3 [shape = 's32[1]{0}', space=sflag, size = 0x4, scoped, tag = 'scoped memory for tpu_custom_call.1']
    %8 = vsyncpa [#allocation3], 0
    // Predicated region
    $region2: #{tpu_custom_call.1} parent=1 // pred_check
      _
    $region3: #{tpu_custom_call.1} parent=1 // pred_check_branch
      %10 = sbr.rel (0) target = $region5
    $region4: #{tpu_custom_call.1} parent=1 // pred_region
      _
    $region5: #{tpu_custom_call.1} parent=1 // pred_fallthru
      _
    // Predicated region
    $region6: #{tpu_custom_call.1} parent=1 // pred_check
      _
    $region7: #{tpu_custom_call.1} parent=1 // pred_check_branch
      %12 = sbr.rel (0) target = $region9
    $region8: #{tpu_custom_call.1} parent=1 // pred_region
      _
    $region9: #{tpu_custom_call.1} parent=1 // pred_fallthru
      _
    // Predicated region
    $region10: #{tpu_custom_call.1} parent=1 // pred_check
      _
    $region11: #{tpu_custom_call.1} parent=1 // pred_check_branch
      %14 = sbr.rel (0) target = $region13
    $region12: #{tpu_custom_call.1} parent=1 // pred_region
      _
    $region13: #{tpu_custom_call.1} parent=1 // pred_fallthru
      _
    %v16 = vld [vmem:[%s0] sm:$0xf]
    %v17 = vld [vmem:[%s0 + $0x4] sm:$0xf]
    %v18 = vld [vmem:[%s0 + $0x8] sm:$0xf]
    %v19 = vld [vmem:[%s0 + $0xc] sm:$0xf]
    %v20 = vld [vmem:[%s0 + $0x10] sm:$0xf]
    %v21 = vld [vmem:[%s0 + $0x14] sm:$0xf]
    %v22 = vld [vmem:[%s0 + $0x18] sm:$0xf]
    %v23 = vld [vmem:[%s0 + $0x1c] sm:$0xf]
    %v24 = vld [vmem:[%s1] sm:$0xff]
    %v25 = vld [vmem:[%s1 + $0x8] sm:$0xff]
    %v26 = vld [vmem:[%s1 + $0x10] sm:$0xff]
    %v27 = vld [vmem:[%s1 + $0x18] sm:$0xff]
    %v28 = vld [vmem:[%s2] sm:$0x3]
    %v30 = vlaneseq
    %v31 = vshrl.u32 %v30, 7
    %v32 = vsub.s32 0, %v31
    %v33 = vrot.slane %v28, %v32
    %v34 = vlaneseq
    %v35 = vshrl.u32 %v34, 7
    %v36 = vsub.s32 1, %v35
    %v37 = vrot.slane %v28, %v36
    %v48 = vunpack.c.l.b16 %v16
    %v49 = vunpack.c.l.b16 %v17
    %v50 = vunpack.c.l.b16 %v18
    %v51 = vunpack.c.l.b16 %v19
    %v52 = vunpack.c.l.b16 %v20
    %v53 = vunpack.c.l.b16 %v21
    %v54 = vunpack.c.l.b16 %v22
    %v55 = vunpack.c.l.b16 %v23
    %v56 = vpack.c.b16 %v49, %v48
    %v57 = vpack.c.b16 %v51, %v50
    %v58 = vpack.c.b16 %v53, %v52
    %v59 = vpack.c.b16 %v55, %v54
    %v64 = vunpack.c.l.b16 %v24
    %v65 = vunpack.c.h.b16 %v24
    %v66 = vunpack.c.l.b16 %v25
    %v67 = vunpack.c.h.b16 %v25
    %v68 = vunpack.c.l.b16 %v26
    %v69 = vunpack.c.h.b16 %v26
    %v70 = vunpack.c.l.b16 %v27
    %v71 = vunpack.c.h.b16 %v27
    %v72 = vpack.c.b16 %v66, %v64
    %v73 = vpack.c.b16 %v67, %v65
    %v74 = vpack.c.b16 %v70, %v68
    %v75 = vpack.c.b16 %v71, %v69
    %vm80 = vcmask 261120
    %v82 = vsel %vm80, %v56, 0
    %v85 = vsel %vm80, %v57, 0
    %v88 = vsel %vm80, %v58, 0
    %v91 = vsel %vm80, %v59, 0
    %93 = vmatprep.subr.bf16.mxu0 %v73
    %94 = vmatpush1.bf16.msra.mxu0 %v72
    %95 = vmatprep.subr.bf16.mxu0 %v75
    %96 = vmatpush1.bf16.msra.mxu0 %v74
    %97 = vmatprep.subr.bf16.mxu0 0
    %98 = vmatpush1.bf16.msra.mxu0 0
    %99 = vmatprep.subr.bf16.mxu0 0
    %100 = vmatpush1.bf16.msra.mxu0 0
    %101 = vmatprep.subr.bf16.mxu0 0
    %102 = vmatpush1.bf16.msra.mxu0 0
    %103 = vmatprep.subr.bf16.mxu0 0
    %104 = vmatpush1.bf16.msra.mxu0 0
    %105 = vmatprep.subr.bf16.mxu0 0
    %106 = vmatpush1.bf16.msra.mxu0 0
    %107 = vmatprep.subr.bf16.mxu0 0
    %108 = vmatpush1.bf16.msra.mxu0 0
    %109 = vmatprep.subr.bf16.mxu0 0
    %110 = vmatpush1.bf16.msra.mxu0 0
    %111 = vmatprep.subr.bf16.mxu0 0
    %112 = vmatpush1.bf16.msra.mxu0 0
    %113 = vmatprep.subr.bf16.mxu0 0
    %114 = vmatpush1.bf16.msra.mxu0 0
    %115 = vmatprep.subr.bf16.mxu0 0
    %116 = vmatpush1.bf16.msra.mxu0 0
    %117 = vmatprep.subr.bf16.mxu0 0
    %118 = vmatpush1.bf16.msra.mxu0 0
    %119 = vmatprep.subr.bf16.mxu0 0
    %120 = vmatpush1.bf16.msra.mxu0 0
    %121 = vmatprep.subr.bf16.mxu0 0
    %122 = vmatpush1.bf16.msra.mxu0 0
    %123 = vmatprep.subr.bf16.mxu0 0
    %124 = vmatpush1.bf16.msra.mxu0 0
    %125 = vmatprep.mubr.bf16.mxu0 0
    %126 = vmatmul.mubr.bf16.gmra.mrb[0].mxu0 %v82
    %v127 = vpop.f32.mrb[0].mxu0
    %v128 = vadd.f32 %v33, %v127
    %v129 = vpop.f32.mrb[0].mxu0
    %v130 = vadd.f32 %v37, %v129
    %v131 = vpop.f32.mrb[0].mxu0
    %v132 = vadd.f32 %v33, %v131
    %v133 = vpop.f32.mrb[0].mxu0
    %v134 = vadd.f32 %v37, %v133
    %135 = vmatprep.mubr.bf16.mxu0 0
    %136 = vmatmul.mubr.bf16.gmra.mrb[0].mxu0 %v85
    %v137 = vpop.f32.mrb[0].mxu0
    %v138 = vadd.f32 %v33, %v137
    %v139 = vpop.f32.mrb[0].mxu0
    %v140 = vadd.f32 %v37, %v139
    %v141 = vpop.f32.mrb[0].mxu0
    %v142 = vadd.f32 %v33, %v141
    %v143 = vpop.f32.mrb[0].mxu0
    %v144 = vadd.f32 %v37, %v143
    %145 = vmatprep.mubr.bf16.mxu0 0
    %146 = vmatmul.mubr.bf16.gmra.mrb[0].mxu0 %v88
    %v147 = vpop.f32.mrb[0].mxu0
    %v148 = vadd.f32 %v33, %v147
    %v149 = vpop.f32.mrb[0].mxu0
    %v150 = vadd.f32 %v37, %v149
    %v151 = vpop.f32.mrb[0].mxu0
    %v152 = vadd.f32 %v33, %v151
    %v153 = vpop.f32.mrb[0].mxu0
    %v154 = vadd.f32 %v37, %v153
    %155 = vmatprep.mubr.bf16.mxu0 0
    %156 = vmatmul.mubr.bf16.gmra.mrb[0].mxu0 %v91
    %v157 = vpop.f32.mrb[0].mxu0
    %v158 = vadd.f32 %v33, %v157
    %v159 = vpop.f32.mrb[0].mxu0
    %v160 = vadd.f32 %v37, %v159
    %v161 = vpop.f32.mrb[0].mxu0
    %v162 = vadd.f32 %v33, %v161
    %v163 = vpop.f32.mrb[0].mxu0
    %v164 = vadd.f32 %v37, %v163
    %165 = vdwg.mxu0
    %v166 = vpack.c.bf16 %v132, %v128
    %v167 = vpack.c.bf16 %v134, %v130
    %v168 = vpack.c.bf16 %v142, %v138
    %v169 = vpack.c.bf16 %v144, %v140
    %v170 = vpack.c.bf16 %v152, %v148
    %v171 = vpack.c.bf16 %v154, %v150
    %v172 = vpack.c.bf16 %v162, %v158
    %v173 = vpack.c.bf16 %v164, %v160
    %v182 = vunpack.c.l.b16 %v166
    %v183 = vunpack.c.l.b16 %v167
    %v184 = vunpack.c.h.b16 %v166
    %v185 = vunpack.c.h.b16 %v167
    %v186 = vunpack.c.l.b16 %v168
    %v187 = vunpack.c.l.b16 %v169
    %v188 = vunpack.c.h.b16 %v168
    %v189 = vunpack.c.h.b16 %v169
    %v190 = vunpack.c.l.b16 %v170
    %v191 = vunpack.c.l.b16 %v171
    %v192 = vunpack.c.h.b16 %v170
    %v193 = vunpack.c.h.b16 %v171
    %v194 = vunpack.c.l.b16 %v172
    %v195 = vunpack.c.l.b16 %v173
    %v196 = vunpack.c.h.b16 %v172
    %v197 = vunpack.c.h.b16 %v173
    %v198 = vpack.c.b16 %v183, %v182
    %v199 = vpack.c.b16 %v185, %v184
    %v200 = vpack.c.b16 %v187, %v186
    %v201 = vpack.c.b16 %v189, %v188
    %v202 = vpack.c.b16 %v191, %v190
    %v203 = vpack.c.b16 %v193, %v192
    %v204 = vpack.c.b16 %v195, %v194
    %v205 = vpack.c.b16 %v197, %v196
    %214 = vst [vmem:[#allocation2] sm:$0xff] %v198
    %215 = vst [vmem:[#allocation2 + $0x8] sm:$0xff] %v199
    %216 = vst [vmem:[#allocation2 + $0x10] sm:$0xff] %v200
    %217 = vst [vmem:[#allocation2 + $0x18] sm:$0xff] %v201
    %218 = vst [vmem:[#allocation2 + $0x20] sm:$0xff] %v202
    %219 = vst [vmem:[#allocation2 + $0x28] sm:$0xff] %v203
    %220 = vst [vmem:[#allocation2 + $0x30] sm:$0xff] %v204
    %221 = vst [vmem:[#allocation2 + $0x38] sm:$0xff] %v205
    // Predicated region
    $region14: #{tpu_custom_call.1} parent=1 // pred_check
      _
    $region15: #{tpu_custom_call.1} parent=1 // pred_check_branch
      %223 = sbr.rel (0) target = $region17
    $region16: #{tpu_custom_call.1} parent=1 // pred_region
      %s225 = ssub.s32 1024, 1024
      %226 = vsyncadd [#allocation3], %s225
      %s227 = sshll.u32 [#allocation2], 4
      %s228 = int_to_ptr.vmem [resolvable:$true] %s227
      %233 = dma.vmem_to_hbm [thread:$0]  %s228, 1024, %s3, [#allocation3], 128, 128, 8
    $region17: #{tpu_custom_call.1} parent=1 // pred_fallthru
      _
    // Predicated region
    $region18: #{tpu_custom_call.1} parent=1 // pred_check
      _
    $region19: #{tpu_custom_call.1} parent=1 // pred_check_branch
      %235 = sbr.rel (0) target = $region21
    $region20: #{tpu_custom_call.1} parent=1 // pred_region
      %236 = dma.done [#allocation3], 1024
    $region21: #{tpu_custom_call.1} parent=1 // pred_fallthru
      _
    %237 = vsyncpa [#allocation3], 1

</llo_original>
